<compile_context>
chip_gen: v5e
topology: v5e:2x2
jax: 0.10.0
libtpu: 0.0.40
codegen_flags: <defaults>
</compile_context>

<pallas_src>
import functools

import jax
import jax.numpy as jnp
from jax.experimental import pallas as pl
from jax.experimental.pallas import tpu as pltpu


def _vmem_limit(nbytes):
    return int(min(max(nbytes, 4 * 1024 * 1024), 48 * 1024 * 1024))


def _pick_batch_block(batch, max_blk=8):
    for cand in range(min(batch, max_blk), 0, -1):
        if batch % cand == 0:
            return cand
    return 1


# ----------------------------------------------------------------------------
# Encoder: stand-in CNN backbone (pointwise conv + ReLU + GAP over HW tiles)
# followed by the trainable Linear(F -> E). Image kept as (B, C, HW) so HW is
# on lanes; pooled sum accumulated in VMEM scratch across HW tiles (hw axis is
# the reduction axis and stays last / on one core).
# ----------------------------------------------------------------------------
def encoder_kernel(img_ref, w_stem_t_ref, w_enc_t_ref, b_enc_ref,
                   out_ref, acc_ref, *, inv_hw):
    hw_i = pl.program_id(1)

    @pl.when(hw_i == 0)
    def _():
        acc_ref[...] = jnp.zeros_like(acc_ref)

    x = img_ref[0]                                            # (C, HW_TILE)
    feats = jnp.dot(w_stem_t_ref[...], x,
                    preferred_element_type=jnp.float32)       # (F, HW_TILE)
    feats = jnp.maximum(feats, 0.0)                           # ReLU
    acc_ref[...] += jnp.sum(feats, axis=1, keepdims=True)     # (F, 1) partial pool

    @pl.when(hw_i == pl.num_programs(1) - 1)
    def _():
        pooled = acc_ref[...] * inv_hw                        # (F, 1) global avg pool
        out_ref[0] = (jnp.dot(w_enc_t_ref[...], pooled,
                              preferred_element_type=jnp.float32)
                      + b_enc_ref[...])                       # (E, 1)


def encode_images(images_nchw, w_stem_t, w_enc_t, b_enc_col):
    B, C, Hi, Wi = images_nchw.shape
    HW = Hi * Wi
    x = images_nchw.reshape(B, C, HW)                         # NCHW -> (B, C, HW), free
    HW_TILE = HW
    for cand in (2048, 1024, 512, 256, 128):                  # biggest 128-multiple tile
        if HW % cand == 0:
            HW_TILE = cand
            break
    n_hw = HW // HW_TILE
    F = w_stem_t.shape[0]
    E = w_enc_t.shape[0]
    vmem = (3 * C * HW_TILE * 4 + F * C * 4 + E * F * 4 + 2 * E * 4
            + F * 4 + (1 << 20))
    out = pl.pallas_call(
        functools.partial(encoder_kernel, inv_hw=1.0 / HW),
        out_shape=jax.ShapeDtypeStruct((B, E, 1), jnp.float32),
        grid=(B, n_hw),
        in_specs=[
            pl.BlockSpec((1, C, HW_TILE), lambda b, h: (b, 0, h)),
            pl.BlockSpec((F, C), lambda b, h: (0, 0)),
            pl.BlockSpec((E, F), lambda b, h: (0, 0)),
            pl.BlockSpec((E, 1), lambda b, h: (0, 0)),
        ],
        out_specs=pl.BlockSpec((1, E, 1), lambda b, h: (b, 0, 0)),
        scratch_shapes=[pltpu.VMEM((F, 1), jnp.float32)],
        compiler_params=pltpu.CompilerParams(
            dimension_semantics=("parallel", "arbitrary"),
            vmem_limit_bytes=_vmem_limit(vmem)),
    )(x, w_stem_t, w_enc_t, b_enc_col)
    return out.reshape(B, E)


# ----------------------------------------------------------------------------
# Hoisted layer-0 input projection  Z0 = bf16(X) @ bf16(W_ih0) + b0
# computed for all (B*S) rows in one (optionally M-tiled) matmul.
# ----------------------------------------------------------------------------
def input_proj_kernel(x_ref, w_ref, b_ref, o_ref):
    x = x_ref[...].astype(jnp.bfloat16)
    o_ref[...] = (jnp.dot(x, w_ref[...], preferred_element_type=jnp.float32)
                  + b_ref[...])


def input_projection(x, w_bf16, b, *, m_tile=512):
    M, K = x.shape
    N = w_bf16.shape[1]
    if M <= m_tile or M % m_tile != 0:
        m_tile = M                                            # single block (small M)
    grid = (M // m_tile,)
    vmem = (3 * m_tile * K * 4 + 3 * m_tile * N * 4
            + int(w_bf16.size) * 2 + N * 4 + (1 << 20))
    return pl.pallas_call(
        input_proj_kernel,
        out_shape=jax.ShapeDtypeStruct((M, N), jnp.float32),
        grid=grid,
        in_specs=[pl.BlockSpec((m_tile, K), lambda i: (i, 0)),
                  pl.BlockSpec(w_bf16.shape, lambda i: (0, 0)),
                  pl.BlockSpec(b.shape, lambda i: (0, 0))],
        out_specs=pl.BlockSpec((m_tile, N), lambda i: (i, 0)),
        compiler_params=pltpu.CompilerParams(
            dimension_semantics=("parallel",),
            vmem_limit_bytes=_vmem_limit(vmem)),
    )(x, w_bf16, b)


# ----------------------------------------------------------------------------
# Fused multi-layer LSTM: grid = (batch_blocks, time), per-layer h/c carried in
# VMEM scratch, weights (bf16, gate-concatenated (H_in, 4H)) resident across
# the whole grid, only the final layer's h written to HBM in batch-major
# (B, S, H) layout (layout folded into the out BlockSpec -> no HBM transpose).
# Gate order matches PyTorch (i, f, g, o).
# ----------------------------------------------------------------------------
def make_fused_lstm_kernel(num_layers, hidden_size):
    L, H = num_layers, hidden_size

    def kernel(*refs):
        zin0_ref = refs[0]                       # (Bblk, 1, 4H) f32, step t
        whh_refs = refs[1:1 + L]                 # each (H, 4H) bf16
        wih_refs = refs[1 + L:2 * L]             # layers 1..L-1, (H, 4H) bf16
        b_refs = refs[2 * L:3 * L - 1]           # layers 1..L-1, (1, 4H) f32
        out_ref = refs[3 * L - 1]                # (Bblk, 1, H)
        h_sc = refs[3 * L]                       # (L, Bblk, H) f32
        c_sc = refs[3 * L + 1]                   # (L, Bblk, H) f32

        t = pl.program_id(1)

        @pl.when(t == 0)
        def _():
            h_sc[...] = jnp.zeros_like(h_sc)
            c_sc[...] = jnp.zeros_like(c_sc)

        x_in = None
        for l in range(L):
            h_prev = h_sc[l]                     # (Bblk, H) f32
            c_prev = c_sc[l]
            # One fused (Bblk, H) @ (H, 4H) matmul per weight (bf16 -> f32 acc).
            z = jnp.dot(h_prev.astype(jnp.bfloat16), whh_refs[l][...],
                        preferred_element_type=jnp.float32)   # (Bblk, 4H)
            if l == 0:
                z = z + zin0_ref[:, 0, :]        # precomputed x@Wih0 + b0
            else:
                z = (z
                     + jnp.dot(x_in.astype(jnp.bfloat16), wih_refs[l - 1][...],
                               preferred_element_type=jnp.float32)
                     + b_refs[l - 1][...])
            # Interleaved gate math (f32) to keep the live vreg set small.
            i_g = jax.nn.sigmoid(z[:, 0 * H:1 * H])
            g_g = jnp.tanh(z[:, 2 * H:3 * H])
            ig = i_g * g_g
            f_g = jax.nn.sigmoid(z[:, 1 * H:2 * H])
            c_new = f_g * c_prev + ig
            o_g = jax.nn.sigmoid(z[:, 3 * H:4 * H])
            h_new = o_g * jnp.tanh(c_new)
            h_sc[l] = h_new
            c_sc[l] = c_new
            x_in = h_new
        out_ref[:, 0, :] = x_in                  # only last layer's h to HBM

    return kernel


def fused_lstm(zin0, whh_list, wih_list, b_list, *, b_blk):
    B, S, fourH = zin0.shape
    H = fourH // 4
    L = len(whh_list)
    n_b = B // b_blk

    in_specs = [pl.BlockSpec((b_blk, 1, fourH), lambda b, t: (b, t, 0))]
    in_specs += [pl.BlockSpec(w.shape, lambda b, t: (0, 0)) for w in whh_list]
    in_specs += [pl.BlockSpec(w.shape, lambda b, t: (0, 0)) for w in wih_list]
    in_specs += [pl.BlockSpec(bb.shape, lambda b, t: (0, 0)) for bb in b_list]

    weight_bytes = sum(int(w.size) * w.dtype.itemsize
                       for w in (list(whh_list) + list(wih_list) + list(b_list)))
    vmem = (weight_bytes
            + 3 * b_blk * fourH * 4              # zin0 block, double-buffered
            + 3 * b_blk * H * 4                  # out block
            + 2 * L * b_blk * H * 4              # h/c scratch
            + (2 << 20))                         # headroom
    return pl.pallas_call(
        make_fused_lstm_kernel(L, H),
        out_shape=jax.ShapeDtypeStruct((B, S, H), jnp.float32),
        grid=(n_b, S),                           # batch blocks parallel (v7x: 2 TCs)
        in_specs=in_specs,
        out_specs=pl.BlockSpec((b_blk, 1, H), lambda b, t: (b, t, 0)),
        scratch_shapes=[pltpu.VMEM((L, b_blk, H), jnp.float32),
                        pltpu.VMEM((L, b_blk, H), jnp.float32)],
        compiler_params=pltpu.CompilerParams(
            dimension_semantics=("parallel", "arbitrary"),
            vmem_limit_bytes=_vmem_limit(vmem)),
    )(zin0, *whh_list, *wih_list, *b_list)


# ----------------------------------------------------------------------------
# Fused vocab projection + softmax(dim=1, over sequence) + argmax(dim=2).
# Uses argmax_v softmax_s(x)[s,v] == argmax_v (x[s,v] - logsumexp_s(x[:,v])),
# so no second HBM pass over the logits. V padded to a multiple of 128
# (padding hoisted to prepare_params); padded columns masked from the argmax
# and sliced off in the wrapper. W_out is bf16, accumulation f32.
# TODO(synk): batch-block the matmul (M = S*Bblk) and tile the V axis with a
# running argmax for production vocab sizes.
# ----------------------------------------------------------------------------
def proj_softmax_argmax_kernel(h_ref, w_ref, b_ref, logits_ref, idx_ref, *,
                               vocab_len):
    h = h_ref[0].astype(jnp.bfloat16)                         # (S, H)
    logits = (jnp.dot(h, w_ref[...], preferred_element_type=jnp.float32)
              + b_ref[...])                                   # (S, Vp)
    logits_ref[0] = logits

    # column-wise (over sequence) logsumexp; padded columns are independent.
    m = jnp.max(logits, axis=0, keepdims=True)                # (1, Vp)
    lse = m + jnp.log(jnp.sum(jnp.exp(logits - m), axis=0, keepdims=True))
    score = logits - lse                                      # (S, Vp)

    Vp = score.shape[-1]
    col = jax.lax.broadcasted_iota(jnp.int32, score.shape, 1)
    score = jnp.where(col < vocab_len, score, -jnp.inf)       # mask padded vocab
    is_max = score >= jnp.max(score, axis=-1, keepdims=True)
    idx = jnp.min(jnp.where(is_max, col, Vp), axis=-1)        # first-max index
    idx_ref[...] = idx[None].astype(jnp.int32)                # (1, S)


def proj_softmax_argmax(hidden, w_out_p, b_out_p, vocab_len):
    B, S, H = hidden.shape
    Vp = w_out_p.shape[1]
    vmem = (int(w_out_p.size) * 2 + Vp * 4
            + 3 * S * H * 4 + 3 * S * Vp * 4
            + 4 * S * Vp * 4 + (1 << 20))
    return pl.pallas_call(
        functools.partial(proj_softmax_argmax_kernel, vocab_len=vocab_len),
        out_shape=(jax.ShapeDtypeStruct((B, S, Vp), jnp.float32),
                   jax.ShapeDtypeStruct((B, S), jnp.int32)),
        grid=(B,),
        in_specs=[pl.BlockSpec((1, S, H), lambda b: (b, 0, 0)),
                  pl.BlockSpec((H, Vp), lambda b: (0, 0)),
                  pl.BlockSpec((1, Vp), lambda b: (0, 0))],
        out_specs=[pl.BlockSpec((1, S, Vp), lambda b: (b, 0, 0)),
                   pl.BlockSpec((1, S), lambda b: (b, 0))],
        compiler_params=pltpu.CompilerParams(
            dimension_semantics=("parallel",),
            vmem_limit_bytes=_vmem_limit(vmem)),
    )(hidden, w_out_p, b_out_p)


# ----------------------------------------------------------------------------
# One-time parameter preparation (transposes, gate concats, bf16 casts, vocab
# padding) -- hoisted out of the forward so no per-call HBM copies of weights.
# ----------------------------------------------------------------------------
def prepare_params(raw):
    V, H = raw["w_out"].shape
    Vp = ((V + 127) // 128) * 128
    lstm = raw["lstm"]
    return {
        "w_stem_t": raw["w_stem"],                                         # (F, C)
        "w_enc_t": raw["w_enc"],                                           # (E, F)
        "b_enc": raw["b_enc"][:, None],                                    # (E, 1)
        "emb": raw["emb"],                                                 # (V, E)
        "w_ih0": lstm[0]["w_ih"].T.astype(jnp.bfloat16),                   # (E, 4H)
        "b0": (lstm[0]["b_ih"] + lstm[0]["b_hh"])[None, :],                # (1, 4H)
        "w_hh": [l["w_hh"].T.astype(jnp.bfloat16) for l in lstm],          # (H, 4H)
        "w_ih_rest": [l["w_ih"].T.astype(jnp.bfloat16) for l in lstm[1:]], # (H, 4H)
        "b_rest": [(l["b_ih"] + l["b_hh"])[None, :] for l in lstm[1:]],    # (1, 4H)
        "w_out_p": jnp.pad(raw["w_out"].T,
                           ((0, 0), (0, Vp - V))).astype(jnp.bfloat16),    # (H, Vp)
        "b_out_p": jnp.pad(raw["b_out"], (0, Vp - V))[None, :],            # (1, Vp)
        "vocab_len": V,
    }


# ----------------------------------------------------------------------------
# Full Img_Cap forward (train=True). Everything is batch-major; no wrapper
# transposes (layout folded into BlockSpecs).
# ----------------------------------------------------------------------------
def img_cap_forward(params, images, captions):
    encoded = encode_images(images, params["w_stem_t"], params["w_enc_t"],
                            params["b_enc"])                  # (B, E)

    word_emb = params["emb"][captions]                        # (B, T, E) gather (glue)
    embeddings = jnp.concatenate([encoded[:, None, :], word_emb], axis=1)  # (B,S,E)
    B, S, E = embeddings.shape
    H = params["w_hh"][0].shape[0]

    # Hoisted layer-0 input projection over all B*S rows (free reshape).
    z0 = input_projection(embeddings.reshape(B * S, E),
                          params["w_ih0"], params["b0"])      # (B*S, 4H)
    zin0 = z0.reshape(B, S, 4 * H)                            # free reshape

    b_blk = _pick_batch_block(B)
    hidden = fused_lstm(zin0, params["w_hh"], params["w_ih_rest"],
                        params["b_rest"], b_blk=b_blk)        # (B, S, H)

    V = params["vocab_len"]
    logits_p, sampled_index = proj_softmax_argmax(
        hidden, params["w_out_p"], params["b_out_p"], V)
    vocab_output = logits_p[:, :, :V]
    return vocab_output, sampled_index


# ----------------------------------------------------------------------------
# Pure-JAX reference (mirrors the kernel's bf16 matmul operands; f32 state /
# elementwise) for sanity checking.
# ----------------------------------------------------------------------------
def reference_forward(p, images, captions):
    f32, bf16 = jnp.float32, jnp.bfloat16

    def bdot(a, w):
        return jnp.dot(a.astype(bf16), w, preferred_element_type=f32)

    B, C, Hi, Wi = images.shape
    x = images.reshape(B, C, Hi * Wi)
    feats = jnp.maximum(jnp.einsum("fc,bcp->bfp", p["w_stem_t"], x), 0.0)
    pooled = jnp.mean(feats, axis=2)
    encoded = pooled @ p["w_enc_t"].T + p["b_enc"][:, 0]

    word_emb = p["emb"][captions]
    seq = jnp.concatenate([encoded[:, None, :], word_emb], axis=1)  # (B, S, E)
    Bq, S, E = seq.shape
    H = p["w_hh"][0].shape[0]

    def gates(z, c):
        i = jax.nn.sigmoid(z[:, 0 * H:1 * H])
        f = jax.nn.sigmoid(z[:, 1 * H:2 * H])
        g = jnp.tanh(z[:, 2 * H:3 * H])
        o = jax.nn.sigmoid(z[:, 3 * H:4 * H])
        c = f * c + i * g
        return o * jnp.tanh(c), c

    x_tm = jnp.transpose(seq, (1, 0, 2))                      # (S, B, E)
    zin0 = (bdot(x_tm.reshape(S * Bq, E), p["w_ih0"]).reshape(S, Bq, 4 * H)
            + p["b0"])

    def step0(carry, z_in):
        h, c = carry
        h, c = gates(z_in + bdot(h, p["w_hh"][0]), c)
        return (h, c), h

    h0 = jnp.zeros((Bq, H), f32)
    _, x_cur = jax.lax.scan(step0, (h0, h0), zin0)
    for l in range(1, len(p["w_hh"])):
        w_ih, w_hh, bias = p["w_ih_rest"][l - 1], p["w_hh"][l], p["b_rest"][l - 1]

        def step(carry, x_t, w_ih=w_ih, w_hh=w_hh, bias=bias):
            h, c = carry
            h, c = gates(bdot(h, w_hh) + bdot(x_t, w_ih) + bias, c)
            return (h, c), h

        _, x_cur = jax.lax.scan(step, (h0, h0), x_cur)

    hidden = jnp.transpose(x_cur, (1, 0, 2))                  # (B, S, H)
    V = p["vocab_len"]
    Vp = p["w_out_p"].shape[1]
    logits = (bdot(hidden.reshape(Bq * S, H), p["w_out_p"]).reshape(Bq, S, Vp)
              + p["b_out_p"])[:, :, :V]
    prob = jax.nn.softmax(logits, axis=1)                     # softmax over sequence
    idx = jnp.argmax(prob, axis=2).astype(jnp.int32)
    return logits, idx


if __name__ == "__main__":
    # Small config consistent with the module's __init__
    B, C, Hi, Wi = 2, 3, 16, 16              # images: NCHW
    T = 8                                    # caption length -> S = T + 1
    E = 32                                   # embedding_size
    Hs = 32                                  # hidden_size
    L = 2                                    # num_layers
    F = 64                                   # scaled-down ResNet50 fc.in_features
    V = 40                                   # vocab_len

    key = jax.random.PRNGKey(0)
    ks = jax.random.split(key, 20)
    s = 0.1
    raw = {
        "w_stem": jax.random.normal(ks[0], (F, C), jnp.float32) * s,
        "w_enc": jax.random.normal(ks[1], (E, F), jnp.float32) * s,
        "b_enc": jax.random.normal(ks[2], (E,), jnp.float32) * s,
        "emb": jax.random.normal(ks[3], (V, E), jnp.float32) * s,
        "lstm": [],
        "w_out": jax.random.normal(ks[4], (V, Hs), jnp.float32) * s,
        "b_out": jax.random.normal(ks[5], (V,), jnp.float32) * s,
    }
    for l in range(L):
        kk = jax.random.split(ks[6 + l], 4)
        in_dim = E if l == 0 else Hs
        raw["lstm"].append({
            "w_ih": jax.random.normal(kk[0], (4 * Hs, in_dim), jnp.float32) * s,
            "w_hh": jax.random.normal(kk[1], (4 * Hs, Hs), jnp.float32) * s,
            "b_ih": jax.random.normal(kk[2], (4 * Hs,), jnp.float32) * s,
            "b_hh": jax.random.normal(kk[3], (4 * Hs,), jnp.float32) * s,
        })

    params = prepare_params(raw)             # once, outside the forward

    images = jax.random.normal(ks[15], (B, C, Hi, Wi), jnp.float32)
    captions = jax.random.randint(ks[16], (B, T), 0, V, dtype=jnp.int32)

    vocab_output, sampled_index = img_cap_forward(params, images, captions)
    jax.block_until_ready((vocab_output, sampled_index))

    assert vocab_output.shape == (B, T + 1, V)
    assert sampled_index.shape == (B, T + 1)

    # Internal consistency: fused argmax must equal argmax of the returned logits.
    prob = jax.nn.softmax(vocab_output, axis=1)
    assert jnp.array_equal(sampled_index, jnp.argmax(prob, axis=2).astype(jnp.int32))

    # Pure-JAX reference (same bf16-rounded weights / operands).
    ref_out, ref_idx = reference_forward(params, images, captions)
    assert jnp.allclose(vocab_output, ref_out, rtol=2e-2, atol=2e-3), (
        float(jnp.max(jnp.abs(vocab_output - ref_out))))
    match = float(jnp.mean((sampled_index == ref_idx).astype(jnp.float32)))
    assert match >= 0.9, match                # ties / bf16 rounding best-effort

    print("KERNEL_OK")
</pallas_src>

<mosaic_0001>
module attributes {stable_mosaic.version = 11 : i64} {
  func.func @encoder_kernel(%arg0: i32, %arg1: i32, %arg2: memref<1x3x256xf32, #tpu.memory_space<vmem>>, %arg3: memref<64x3xf32, #tpu.memory_space<vmem>>, %arg4: memref<32x64xf32, #tpu.memory_space<vmem>>, %arg5: memref<32x1xf32, #tpu.memory_space<vmem>>, %arg6: memref<1x32x1xf32, #tpu.memory_space<vmem>>, %arg7: memref<64x1xf32, #tpu.memory_space<vmem>>) attributes {dimension_semantics = [#tpu.dimension_semantics<parallel>, #tpu.dimension_semantics<arbitrary>], iteration_bounds = array<i64: 2, 1>, scalar_prefetch = 0 : i64, scratch_operands = 1 : i64, tpu.core_type = #tpu.core_type<tc>, window_params = [{transform_indices = @transform_0, window_bounds = array<i64: 1, 3, 256>}, {pipeline_mode = #tpu.pipeline_mode<synchronous>, transform_indices = @transform_1, window_bounds = array<i64: 64, 3>}, {pipeline_mode = #tpu.pipeline_mode<synchronous>, transform_indices = @transform_2, window_bounds = array<i64: 32, 64>}, {pipeline_mode = #tpu.pipeline_mode<synchronous>, transform_indices = @transform_3, window_bounds = array<i64: 32, 1>}, {transform_indices = @transform_4, window_bounds = array<i64: 1, 32, 1>}]} {
    %c0_i32 = arith.constant 0 : i32
    %0 = arith.cmpi eq, %arg1, %c0_i32 : i32
    %1 = arith.extui %0 : i1 to i32
    %c0_i32_0 = arith.constant 0 : i32
    %2 = arith.cmpi ne, %1, %c0_i32_0 : i32
    scf.if %2 {
      %cst_13 = arith.constant 0.000000e+00 : f32
      %17 = vector.broadcast %cst_13 : f32 to vector<64x1xf32>
      %c0_14 = arith.constant 0 : index
      %c0_15 = arith.constant 0 : index
      %18 = vector.load %arg7[%c0_14, %c0_15] : memref<64x1xf32, #tpu.memory_space<vmem>>, vector<64x1xf32>
      tpu.vector_store %arg7[%c0_14, %c0_15], %17 {strides = array<i32>} : memref<64x1xf32, #tpu.memory_space<vmem>>, vector<64x1xf32>,
    } else {
    }
    %c0 = arith.constant 0 : index
    %c0_1 = arith.constant 0 : index
    %c0_2 = arith.constant 0 : index
    %3 = vector.load %arg2[%c0, %c0_1, %c0_2] : memref<1x3x256xf32, #tpu.memory_space<vmem>>, vector<1x3x256xf32>
    %4 = vector.shape_cast %3 : vector<1x3x256xf32> to vector<3x256xf32>
    %c0_3 = arith.constant 0 : index
    %c0_4 = arith.constant 0 : index
    %5 = vector.load %arg3[%c0_3, %c0_4] : memref<64x3xf32, #tpu.memory_space<vmem>>, vector<64x3xf32>
    %cst = arith.constant dense<0.000000e+00> : vector<64x256xf32>
    %6 = tpu.matmul %5, %4, %cst {dimension_numbers = #tpu.dot_dimension_numbers<[1], [0], [0], [1], [0, 0, 1, 1], [], []>} : vector<64x3xf32>, vector<3x256xf32>, vector<64x256xf32> -> vector<64x256xf32>
    %cst_5 = arith.constant 0.000000e+00 : f32
    %7 = vector.broadcast %cst_5 : f32 to vector<64x256xf32>
    %8 = arith.maximumf %6, %7 : vector<64x256xf32>
    %c0_6 = arith.constant 0 : index
    %c0_7 = arith.constant 0 : index
    %9 = vector.load %arg7[%c0_6, %c0_7] : memref<64x1xf32, #tpu.memory_space<vmem>>, vector<64x1xf32>
    %cst_8 = arith.constant dense<0.000000e+00> : vector<64xf32>
    %10 = vector.multi_reduction <add>, %8, %cst_8 [1] : vector<64x256xf32> to vector<64xf32>
    %11 = vector.shape_cast %10 : vector<64xf32> to vector<64x1xf32>
    %12 = arith.addf %9, %11 : vector<64x1xf32>
    %c0_9 = arith.constant 0 : index
    %c0_10 = arith.constant 0 : index
    %13 = vector.load %arg7[%c0_9, %c0_10] : memref<64x1xf32, #tpu.memory_space<vmem>>, vector<64x1xf32>
    tpu.vector_store %arg7[%c0_9, %c0_10], %12 {strides = array<i32>} : memref<64x1xf32, #tpu.memory_space<vmem>>, vector<64x1xf32>,
    %c0_i32_11 = arith.constant 0 : i32
    %14 = arith.cmpi eq, %arg1, %c0_i32_11 : i32
    %15 = arith.extui %14 : i1 to i32
    %c0_i32_12 = arith.constant 0 : i32
    %16 = arith.cmpi ne, %15, %c0_i32_12 : i32
    scf.if %16 {
      %c0_13 = arith.constant 0 : index
      %c0_14 = arith.constant 0 : index
      %17 = vector.load %arg7[%c0_13, %c0_14] : memref<64x1xf32, #tpu.memory_space<vmem>>, vector<64x1xf32>
      %cst_15 = arith.constant 3.906250e-03 : f32
      %18 = vector.broadcast %cst_15 : f32 to vector<64x1xf32>
      %19 = arith.mulf %17, %18 : vector<64x1xf32>
      %c0_16 = arith.constant 0 : index
      %c0_17 = arith.constant 0 : index
      %20 = vector.load %arg4[%c0_16, %c0_17] : memref<32x64xf32, #tpu.memory_space<vmem>>, vector<32x64xf32>
      %cst_18 = arith.constant dense<0.000000e+00> : vector<32x1xf32>
      %21 = tpu.matmul %20, %19, %cst_18 {dimension_numbers = #tpu.dot_dimension_numbers<[1], [0], [0], [1], [0, 0, 1, 1], [], []>} : vector<32x64xf32>, vector<64x1xf32>, vector<32x1xf32> -> vector<32x1xf32>
      %c0_19 = arith.constant 0 : index
      %c0_20 = arith.constant 0 : index
      %22 = vector.load %arg5[%c0_19, %c0_20] : memref<32x1xf32, #tpu.memory_space<vmem>>, vector<32x1xf32>
      %23 = arith.addf %21, %22 : vector<32x1xf32>
      %c0_21 = arith.constant 0 : index
      %c0_22 = arith.constant 0 : index
      %c0_23 = arith.constant 0 : index
      %24 = vector.load %arg6[%c0_21, %c0_22, %c0_23] : memref<1x32x1xf32, #tpu.memory_space<vmem>>, vector<1x32x1xf32>
      %25 = vector.shape_cast %24 : vector<1x32x1xf32> to vector<32x1xf32>
      %26 = vector.shape_cast %23 : vector<32x1xf32> to vector<1x32x1xf32>
      tpu.vector_store %arg6[%c0_21, %c0_22, %c0_23], %26 {strides = array<i32>} : memref<1x32x1xf32, #tpu.memory_space<vmem>>, vector<1x32x1xf32>,
    } else {
    }
    return
  }
  func.func @transform_0(%arg0: i32, %arg1: i32) -> (i32, i32, i32) {
    %c0_i32 = arith.constant 0 : i32
    %c0_i32_0 = arith.constant 0 : i32
    return %arg0, %c0_i32, %arg1 : i32, i32, i32
  }
  func.func @transform_1(%arg0: i32, %arg1: i32) -> (i32, i32) {
    %c0_i32 = arith.constant 0 : i32
    %c0_i32_0 = arith.constant 0 : i32
    %c0_i32_1 = arith.constant 0 : i32
    return %c0_i32, %c0_i32_0 : i32, i32
  }
  func.func @transform_2(%arg0: i32, %arg1: i32) -> (i32, i32) {
    %c0_i32 = arith.constant 0 : i32
    %c0_i32_0 = arith.constant 0 : i32
    %c0_i32_1 = arith.constant 0 : i32
    return %c0_i32, %c0_i32_0 : i32, i32
  }
  func.func @transform_3(%arg0: i32, %arg1: i32) -> (i32, i32) {
    %c0_i32 = arith.constant 0 : i32
    %c0_i32_0 = arith.constant 0 : i32
    %c0_i32_1 = arith.constant 0 : i32
    return %c0_i32, %c0_i32_0 : i32, i32
  }
  func.func @transform_4(%arg0: i32, %arg1: i32) -> (i32, i32, i32) {
    %c0_i32 = arith.constant 0 : i32
    %c0_i32_0 = arith.constant 0 : i32
    %c0_i32_1 = arith.constant 0 : i32
    return %arg0, %c0_i32, %c0_i32_0 : i32, i32, i32
  }
}

</mosaic_0001>

<llo_original>
// kernel: tpu_custom_call.1
$region0: #{tpu_custom_call.1}
  #allocation0 [shape = 'u32[]', space=smem, size = 0x4, offset = 0x4, fixed_abs, tag = 'smem constant byte address 0x4 - core index']
  #allocation1 [shape = 'u32[72,128]{1,0:T(1,128)}', space=vmem, size = 0x9000, scoped, tag = 'internal scratch']
  #allocation2 [shape = 'f32[64,1]{1,0:T(8,128)}', space=vmem, size = 0x8000, scoped, tag = 'scratch operand']
  %s0 = inlined_call_operand.vmem [shape: f32[2,3,256], index: 0, kind: input, shape index: {}]
  %s1 = inlined_call_operand.vmem [shape: f32[64,3], index: 1, kind: input, shape index: {}]
  %s2 = inlined_call_operand.vmem [shape: f32[32,64], index: 2, kind: input, shape index: {}]
  %s3 = inlined_call_operand.vmem [shape: f32[32,1], index: 3, kind: input, shape index: {}]
  %s4 = inlined_call_operand.vmem [shape: f32[2,32,1], index: 4, kind: output, shape index: {}]
  %s5 = sld [smem:[#allocation0]]
  $region57: #{tpu_custom_call.1} parent=0
    _
  %s7 = ssub.s32 1, %s5
  %s8 = scalar_select 0, %s7, %s5
  loop: start=0, step=1, limit=4
  $region2: #{tpu_custom_call.1} parent=0 // loop_pre_header
    _
  $region3: #{tpu_custom_call.1} parent=0 // loop_header
    %s10 = sphi 0, %s14
    %p11 = scmp.ge.s32.totalorder %s10, 4
    %s17 = sphi 0, %s29
    %s18 = sphi 0, %s25
    %s19 = sphi 0, %s17
    %s20 = sphi 0, %s18
    %s21 = sphi 0, %s19
    %s22 = sphi 0, %s20
    %s34 = sphi 0, %s36
    %s37 = sphi 0, %s34
    %s38 = sphi 0, %s37
    %s54 = sphi 0, %s38
    %s58 = sphi 0, %s58
    %s60 = sphi 0, %s58
    %s61 = sphi 0, %s60
    %s75 = sphi 0, %s61
    %s79 = sphi 0, %s79
    %s81 = sphi 0, %s79
    %s82 = sphi 0, %s81
    %s96 = sphi 0, %s82
    %s100 = sphi 0, %s100
    %s102 = sphi 0, %s100
    %s103 = sphi 0, %s102
    %s117 = sphi 0, %s103
    %s123 = sphi 0, %s125
    %s126 = sphi 0, %s123
    %s127 = sphi 0, %s126
    %s143 = sphi 0, %s127
  $region4: #{tpu_custom_call.1} parent=0 // loop_header_branch
    %13 = sbr.rel (%p11) target = $region8
  $region5: #{tpu_custom_call.1} parent=0 // loop_body
    %s15 = ssub.s32 %s10, 1
    %s16 = ssub.s32 %s10, 2
    %s23 = sadd.s32 1, %s18
    %p24 = scmp.ge.s32.totalorder %s23, 1
    %s25 = scalar_select %p24, 0, %s23
    %s26 = sadd.s32 1, %s17
    %s27 = scalar_select %p24, %s26, %s17
    %p28 = scmp.ge.s32.totalorder %s27, 2
    %s29 = scalar_select %p28, 0, %s27
    %s30 = ssub.s32 %s17, %s29
    %s31 = ssub.s32 %s18, %s25
    %s32 = sor.u32 %s30, %s31
    %p33 = scmp.eq.s32.totalorder %s32, 0
    %s35 = sadd.s32 %s34, 1
    %s36 = scalar_select %p33, %s34, %s35
    %p39 = pneg %p33
    %p40 = scmp.eq.s32.totalorder %s10, 1
    %p41 = por %p39, %p40
    %p42 = scmp.ne.s32.totalorder %s34, %s37
    %p43 = scmp.eq.s32.totalorder %s10, 0
    %p44 = por %p42, %p43
    %p45 = scmp.ne.s32.totalorder %s34, %s37
    %p46 = scmp.eq.s32.totalorder %s15, 1
    %p47 = por %p45, %p46
    %p48 = scmp.ne.s32.totalorder %s37, %s38
    %p49 = scmp.eq.s32.totalorder %s15, 0
    %p50 = por %p48, %p49
    %p51 = scmp.ne.s32.totalorder %s37, %s38
    %p52 = scmp.eq.s32.totalorder %s16, 1
    %p53 = por %p51, %p52
    %p55 = scmp.ne.s32.totalorder %s38, %s54
    %p56 = scmp.eq.s32.totalorder %s16, 0
    %p57 = por %p55, %p56
    %s59 = sadd.s32 %s58, 1
    %p62 = scmp.eq.s32.totalorder %s10, 1
    %p63 = scmp.ne.s32.totalorder %s58, %s60
    %p64 = scmp.eq.s32.totalorder %s10, 0
    %p65 = por %p63, %p64
    %p66 = scmp.ne.s32.totalorder %s58, %s60
    %p67 = scmp.eq.s32.totalorder %s15, 1
    %p68 = por %p66, %p67
    %p69 = scmp.ne.s32.totalorder %s60, %s61
    %p70 = scmp.eq.s32.totalorder %s15, 0
    %p71 = por %p69, %p70
    %p72 = scmp.ne.s32.totalorder %s60, %s61
    %p73 = scmp.eq.s32.totalorder %s16, 1
    %p74 = por %p72, %p73
    %p76 = scmp.ne.s32.totalorder %s61, %s75
    %p77 = scmp.eq.s32.totalorder %s16, 0
    %p78 = por %p76, %p77
    %s80 = sadd.s32 %s79, 1
    %p83 = scmp.eq.s32.totalorder %s10, 1
    %p84 = scmp.ne.s32.totalorder %s79, %s81
    %p85 = scmp.eq.s32.totalorder %s10, 0
    %p86 = por %p84, %p85
    %p87 = scmp.ne.s32.totalorder %s79, %s81
    %p88 = scmp.eq.s32.totalorder %s15, 1
    %p89 = por %p87, %p88
    %p90 = scmp.ne.s32.totalorder %s81, %s82
    %p91 = scmp.eq.s32.totalorder %s15, 0
    %p92 = por %p90, %p91
    %p93 = scmp.ne.s32.totalorder %s81, %s82
    %p94 = scmp.eq.s32.totalorder %s16, 1
    %p95 = por %p93, %p94
    %p97 = scmp.ne.s32.totalorder %s82, %s96
    %p98 = scmp.eq.s32.totalorder %s16, 0
    %p99 = por %p97, %p98
    %s101 = sadd.s32 %s100, 1
    %p104 = scmp.eq.s32.totalorder %s10, 1
    %p105 = scmp.ne.s32.totalorder %s100, %s102
    %p106 = scmp.eq.s32.totalorder %s10, 0
    %p107 = por %p105, %p106
    %p108 = scmp.ne.s32.totalorder %s100, %s102
    %p109 = scmp.eq.s32.totalorder %s15, 1
    %p110 = por %p108, %p109
    %p111 = scmp.ne.s32.totalorder %s102, %s103
    %p112 = scmp.eq.s32.totalorder %s15, 0
    %p113 = por %p111, %p112
    %p114 = scmp.ne.s32.totalorder %s102, %s103
    %p115 = scmp.eq.s32.totalorder %s16, 1
    %p116 = por %p114, %p115
    %p118 = scmp.ne.s32.totalorder %s103, %s117
    %p119 = scmp.eq.s32.totalorder %s16, 0
    %p120 = por %p118, %p119
    %s121 = ssub.s32 %s17, %s29
    %p122 = scmp.eq.s32.totalorder %s121, 0
    %s124 = sadd.s32 %s123, 1
    %s125 = scalar_select %p122, %s123, %s124
    %p128 = pneg %p122
    %p129 = scmp.eq.s32.totalorder %s10, 1
    %p130 = por %p128, %p129
    %p131 = scmp.ne.s32.totalorder %s123, %s126
    %p132 = scmp.eq.s32.totalorder %s10, 0
    %p133 = por %p131, %p132
    %p134 = scmp.ne.s32.totalorder %s123, %s126
    %p135 = scmp.eq.s32.totalorder %s15, 1
    %p136 = por %p134, %p135
    %p137 = scmp.ne.s32.totalorder %s126, %s127
    %p138 = scmp.eq.s32.totalorder %s15, 0
    %p139 = por %p137, %p138
    %p140 = scmp.ne.s32.totalorder %s126, %s127
    %p141 = scmp.eq.s32.totalorder %s16, 1
    %p142 = por %p140, %p141
    %p144 = scmp.ne.s32.totalorder %s127, %s143
    %p145 = scmp.eq.s32.totalorder %s16, 0
    %p146 = por %p144, %p145
    %p147 = scmp.le.s32.totalorder 1, %s10
    %p148 = scmp.lt.s32.totalorder %s10, 3
    %p149 = pnand %p147, %p148
    %p150 = pneg %p149
    // Predicated region
    $region9: #{tpu_custom_call.1} parent=5 // pred_check
      _
    $region10: #{tpu_custom_call.1} parent=5 // pred_check_branch
      %152 = sbr.rel (%p149) target = $region12
    $region11: #{tpu_custom_call.1} parent=5 // pred_region
      %s153 = ssub.s32 %s10, 1
      // Predicated region
      $region13: #{tpu_custom_call.1} parent=11 // pred_check
        %p154 = pneg %p71
      $region14: #{tpu_custom_call.1} parent=11 // pred_check_branch
        %156 = sbr.rel (%p154) target = $region16
      $region15: #{tpu_custom_call.1} parent=11 // pred_region
        _
      $region16: #{tpu_custom_call.1} parent=11 // pred_fallthru
        _
      // Predicated region
      $region17: #{tpu_custom_call.1} parent=11 // pred_check
        %p157 = pneg %p92
      $region18: #{tpu_custom_call.1} parent=11 // pred_check_branch
        %159 = sbr.rel (%p157) target = $region20
      $region19: #{tpu_custom_call.1} parent=11 // pred_region
        _
      $region20: #{tpu_custom_call.1} parent=11 // pred_fallthru
        _
      // Predicated region
      $region21: #{tpu_custom_call.1} parent=11 // pred_check
        %p160 = pneg %p113
      $region22: #{tpu_custom_call.1} parent=11 // pred_check_branch
        %162 = sbr.rel (%p160) target = $region24
      $region23: #{tpu_custom_call.1} parent=11 // pred_region
        _
      $region24: #{tpu_custom_call.1} parent=11 // pred_fallthru
        _
    $region12: #{tpu_custom_call.1} parent=5 // pred_fallthru
      _
    %p163 = scmp.lt.s32.totalorder %s10, 2
    // Predicated region
    $region25: #{tpu_custom_call.1} parent=5 // pred_check
      %p164 = pneg %p163
    $region26: #{tpu_custom_call.1} parent=5 // pred_check_branch
      %166 = sbr.rel (%p164) target = $region28
    $region27: #{tpu_custom_call.1} parent=5 // pred_region
      // Predicated region
      $region29: #{tpu_custom_call.1} parent=27 // pred_check
        %p167 = pneg %p44
      $region30: #{tpu_custom_call.1} parent=27 // pred_check_branch
        %169 = sbr.rel (%p167) target = $region32
      $region31: #{tpu_custom_call.1} parent=27 // pred_region
        %s170 = smul.u32 2, %s18
        %p171 = scmp.lt.s32.totalorder %s17, 1
        %s172 = scalar_select %p171, %s17, 1
        %p173 = scmp.lt.s32.totalorder %s170, 1
        %s174 = scalar_select %p173, %s170, 1
        %s175 = smul.addr %s172, 2
        %s176 = sadd.s32 %s174, %s175
        %s177 = smul.addr %s176, 4
        %s178 = scalar_lea.vmem %s0, %s177
        %s179 = smul.u32 2, %s18
      $region32: #{tpu_custom_call.1} parent=27 // pred_fallthru
        _
    $region28: #{tpu_custom_call.1} parent=5 // pred_fallthru
      _
    %p180 = scmp.le.s32.totalorder 1, %s10
    %p181 = scmp.lt.s32.totalorder %s10, 3
    %p182 = pnand %p180, %p181
    %p183 = pneg %p182
    // Predicated region
    $region33: #{tpu_custom_call.1} parent=5 // pred_check
      _
    $region34: #{tpu_custom_call.1} parent=5 // pred_check_branch
      %185 = sbr.rel (%p182) target = $region36
    $region35: #{tpu_custom_call.1} parent=5 // pred_region
      %s186 = ssub.s32 %s10, 1
      %s187 = smul.u32 2, %s20
      %p188 = scmp.lt.s32.totalorder %s19, 1
      %s189 = scalar_select %p188, %s19, 1
      %p190 = scmp.lt.s32.totalorder %s187, 1
      %s191 = scalar_select %p190, %s187, 1
      %s192 = smul.addr %s189, 2
      %s193 = sadd.s32 %s191, %s192
      %s194 = smul.addr %s193, 4
      %s195 = scalar_lea.vmem %s0, %s194
      %p196 = pneg %p50
      %p197 = pneg %p47
      %p198 = pneg %p71
      %p199 = pneg %p68
      %p200 = pneg %p92
      %p201 = pneg %p89
      %p202 = pneg %p113
      %p203 = pneg %p110
      %p204 = pneg %p139
      %p205 = pneg %p136
      %p206 = scmp.lt.s32.totalorder %s19, 1
      %s207 = scalar_select %p206, %s19, 1
      %s208 = smul.addr %s207, 4
      %s209 = smul.addr %s208, 8
      %s210 = scalar_lea.vmem %s4, %s209
      %s211 = smul.u32 2, %s20
      %p212 = scmp.lt.s32.totalorder %s19, 1
      %s213 = scalar_select %p212, %s19, 1
      %p214 = scmp.lt.s32.totalorder %s211, 1
      %s215 = scalar_select %p214, %s211, 1
      %s216 = smul.addr %s213, 2
      %s217 = sadd.s32 %s215, %s216
      %s218 = smul.addr %s217, 4
      %s219 = scalar_lea.vmem %s0, %s218
      %s220 = smul.u32 2, %s20
      %p221 = scmp.lt.s32.totalorder %s19, 1
      %s222 = scalar_select %p221, %s19, 1
      %s223 = smul.addr %s222, 4
      %s224 = smul.addr %s223, 8
      %s225 = scalar_lea.vmem %s4, %s224
      %p226 = scmp.eq.s32.totalorder %s20, 0
      // Predicated region
      $region37: #{tpu_custom_call.1} parent=35 // pred_check
        %p227 = pneg %p226
      $region38: #{tpu_custom_call.1} parent=35 // pred_check_branch
        %229 = sbr.rel (%p227) target = $region40
      $region39: #{tpu_custom_call.1} parent=35 // pred_region
        %vm230 = vcmask 7168
        %231 = vst.msk [vmem:[#allocation2] sm:$0xff] %vm230, 0.0
        %232 = vst.msk [vmem:[#allocation2 + $0x8] sm:$0xff] %vm230, 0.0
        %233 = vst.msk [vmem:[#allocation2 + $0x10] sm:$0xff] %vm230, 0.0
        %234 = vst.msk [vmem:[#allocation2 + $0x18] sm:$0xff] %vm230, 0.0
        %235 = vst.msk [vmem:[#allocation2 + $0x20] sm:$0xff] %vm230, 0.0
        %236 = vst.msk [vmem:[#allocation2 + $0x28] sm:$0xff] %vm230, 0.0
        %237 = vst.msk [vmem:[#allocation2 + $0x30] sm:$0xff] %vm230, 0.0
        %238 = vst.msk [vmem:[#allocation2 + $0x38] sm:$0xff] %vm230, 0.0
      $region40: #{tpu_custom_call.1} parent=35 // pred_fallthru
        _
      %v239 = vld [vmem:[%s219] sm:$0x77]
      %v240 = vld [vmem:[%s1] sm:$0xff]
      %v241 = vld [vmem:[%s1 + $0x8] sm:$0xff]
      %v242 = vld [vmem:[%s1 + $0x10] sm:$0xff]
      %v243 = vld [vmem:[%s1 + $0x18] sm:$0xff]
      %v244 = vld [vmem:[%s1 + $0x20] sm:$0xff]
      %v245 = vld [vmem:[%s1 + $0x28] sm:$0xff]
      %v246 = vld [vmem:[%s1 + $0x30] sm:$0xff]
      %v247 = vld [vmem:[%s1 + $0x38] sm:$0xff]
      %249 = vst [vmem:[#allocation1] ss:$2 sm:$0xff] %v239
      %v250 = vld.sshfl [vmem:[#allocation1] sm:$0xff pattern:$0x75316420]
      %v251 = vld.sshfl [vmem:[#allocation1 + $0x8] sm:$0xff pattern:$0x75316420]
      %vm252 = vcmask 23552
      %v254 = vsel %vm252, %v240, 0
      %v257 = vsel %vm252, %v241, 0
      %v260 = vsel %vm252, %v242, 0
      %v263 = vsel %vm252, %v243, 0
      %v266 = vsel %vm252, %v244, 0
      %v269 = vsel %vm252, %v245, 0
      %v272 = vsel %vm252, %v246, 0
      %v275 = vsel %vm252, %v247, 0
      %vm277 = vcmask 1042432
      %v278 = vsel %vm277, %v250, 0
      %v280 = vsel %vm277, %v251, 0
      %282 = vmatpush.msra.mxu0 0.0
      %283 = vmatpush.msra.mxu0 0.0
      %284 = vmatpush.msra.mxu0 0.0
      %285 = vmatpush.msra.mxu0 0.0
      %286 = vmatpush.msra.mxu0 0.0
      %287 = vmatpush.msra.mxu0 0.0
      %288 = vmatpush.msra.mxu0 0.0
      %289 = vmatpush.msra.mxu0 0.0
      %290 = vmatpush.msra.mxu0 0.0
      %291 = vmatpush.msra.mxu0 0.0
      %292 = vmatpush.msra.mxu0 0.0
      %293 = vmatpush.msra.mxu0 0.0
      %294 = vmatpush.msra.mxu0 0.0
      %295 = vmatpush.msra.mxu0 0.0
      %296 = vmatpush.msra.mxu0 0.0
      %297 = vmatpush.msra.mxu0 %v278
      %298 = vmatmul.f32.gmra.mxu0 %v254
      %v299 = vpop.f32.mrf.mxu0
      %v300 = vadd.f32 0.0, %v299
      %301 = vmatmul.f32.gmra.mxu0 %v257
      %v302 = vpop.f32.mrf.mxu0
      %v303 = vadd.f32 0.0, %v302
      %304 = vmatmul.f32.gmra.mxu0 %v260
      %v305 = vpop.f32.mrf.mxu0
      %v306 = vadd.f32 0.0, %v305
      %307 = vmatmul.f32.gmra.mxu0 %v263
      %v308 = vpop.f32.mrf.mxu0
      %v309 = vadd.f32 0.0, %v308
      %310 = vmatmul.f32.gmra.mxu0 %v266
      %v311 = vpop.f32.mrf.mxu0
      %v312 = vadd.f32 0.0, %v311
      %313 = vmatmul.f32.gmra.mxu0 %v269
      %v314 = vpop.f32.mrf.mxu0
      %v315 = vadd.f32 0.0, %v314
      %316 = vmatmul.f32.gmra.mxu0 %v272
      %v317 = vpop.f32.mrf.mxu0
      %v318 = vadd.f32 0.0, %v317
      %319 = vmatmul.f32.gmra.mxu0 %v275
      %v320 = vpop.f32.mrf.mxu0
      %v321 = vadd.f32 0.0, %v320
      %322 = vdwg.mxu0
      %323 = vmatpush.msra.mxu0 0.0
      %324 = vmatpush.msra.mxu0 0.0
      %325 = vmatpush.msra.mxu0 0.0
      %326 = vmatpush.msra.mxu0 0.0
      %327 = vmatpush.msra.mxu0 0.0
      %328 = vmatpush.msra.mxu0 0.0
      %329 = vmatpush.msra.mxu0 0.0
      %330 = vmatpush.msra.mxu0 0.0
      %331 = vmatpush.msra.mxu0 0.0
      %332 = vmatpush.msra.mxu0 0.0
      %333 = vmatpush.msra.mxu0 0.0
      %334 = vmatpush.msra.mxu0 0.0
      %335 = vmatpush.msra.mxu0 0.0
      %336 = vmatpush.msra.mxu0 0.0
      %337 = vmatpush.msra.mxu0 0.0
      %338 = vmatpush.msra.mxu0 %v280
      %339 = vmatmul.f32.gmra.mxu0 %v254
      %v340 = vpop.f32.mrf.mxu0
      %v341 = vadd.f32 0.0, %v340
      %342 = vmatmul.f32.gmra.mxu0 %v257
      %v343 = vpop.f32.mrf.mxu0
      %v344 = vadd.f32 0.0, %v343
      %345 = vmatmul.f32.gmra.mxu0 %v260
      %v346 = vpop.f32.mrf.mxu0
      %v347 = vadd.f32 0.0, %v346
      %348 = vmatmul.f32.gmra.mxu0 %v263
      %v349 = vpop.f32.mrf.mxu0
      %v350 = vadd.f32 0.0, %v349
      %351 = vmatmul.f32.gmra.mxu0 %v266
      %v352 = vpop.f32.mrf.mxu0
      %v353 = vadd.f32 0.0, %v352
      %354 = vmatmul.f32.gmra.mxu0 %v269
      %v355 = vpop.f32.mrf.mxu0
      %v356 = vadd.f32 0.0, %v355
      %357 = vmatmul.f32.gmra.mxu0 %v272
      %v358 = vpop.f32.mrf.mxu0
      %v359 = vadd.f32 0.0, %v358
      %360 = vmatmul.f32.gmra.mxu0 %v275
      %v361 = vpop.f32.mrf.mxu0
      %v362 = vadd.f32 0.0, %v361
      %363 = vdwg.mxu0
      %v364 = vmax.f32 %v300, 0.0
      %v365 = vmax.f32 %v341, 0.0
      %v366 = vmax.f32 %v303, 0.0
      %v367 = vmax.f32 %v344, 0.0
      %v368 = vmax.f32 %v306, 0.0
      %v369 = vmax.f32 %v347, 0.0
      %v370 = vmax.f32 %v309, 0.0
      %v371 = vmax.f32 %v350, 0.0
      %v372 = vmax.f32 %v312, 0.0
      %v373 = vmax.f32 %v353, 0.0
      %v374 = vmax.f32 %v315, 0.0
      %v375 = vmax.f32 %v356, 0.0
      %v376 = vmax.f32 %v318, 0.0
      %v377 = vmax.f32 %v359, 0.0
      %v378 = vmax.f32 %v321, 0.0
      %v379 = vmax.f32 %v362, 0.0
      %v380 = vld [vmem:[#allocation2] sm:$0xff]
      %v381 = vld [vmem:[#allocation2 + $0x8] sm:$0xff]
      %v382 = vld [vmem:[#allocation2 + $0x10] sm:$0xff]
      %v383 = vld [vmem:[#allocation2 + $0x18] sm:$0xff]
      %v384 = vld [vmem:[#allocation2 + $0x20] sm:$0xff]
      %v385 = vld [vmem:[#allocation2 + $0x28] sm:$0xff]
      %v386 = vld [vmem:[#allocation2 + $0x30] sm:$0xff]
      %v387 = vld [vmem:[#allocation2 + $0x38] sm:$0xff]
      %v388 = vadd.f32 %v364, %v365
      %389 = vadd.xlane.f32.xlu0 %v388
      %v390 = vpop.xlane.xlu0 %389
      %v391 = vadd.f32 %v366, %v367
      %392 = vadd.xlane.f32.xlu0 %v391
      %v393 = vpop.xlane.xlu0 %392
      %v394 = vadd.f32 %v368, %v369
      %395 = vadd.xlane.f32.xlu0 %v394
      %v396 = vpop.xlane.xlu0 %395
      %v397 = vadd.f32 %v370, %v371
      %398 = vadd.xlane.f32.xlu0 %v397
      %v399 = vpop.xlane.xlu0 %398
      %v400 = vadd.f32 %v372, %v373
      %401 = vadd.xlane.f32.xlu0 %v400
      %v402 = vpop.xlane.xlu0 %401
      %v403 = vadd.f32 %v374, %v375
      %404 = vadd.xlane.f32.xlu0 %v403
      %v405 = vpop.xlane.xlu0 %404
      %v406 = vadd.f32 %v376, %v377
      %407 = vadd.xlane.f32.xlu0 %v406
      %v408 = vpop.xlane.xlu0 %407
      %v409 = vadd.f32 %v378, %v379
      %410 = vadd.xlane.f32.xlu0 %v409
      %v411 = vpop.xlane.xlu0 %410
      %v412 = vadd.f32 %v380, %v390
      %v413 = vadd.f32 %v381, %v393
      %v414 = vadd.f32 %v382, %v396
      %v415 = vadd.f32 %v383, %v399
      %v416 = vadd.f32 %v384, %v402
      %v417 = vadd.f32 %v385, %v405
      %v418 = vadd.f32 %v386, %v408
      %v419 = vadd.f32 %v387, %v411
      %vm420 = vcmask 7168
      %421 = vst.msk [vmem:[#allocation2] sm:$0xff] %vm420, %v412
      %422 = vst.msk [vmem:[#allocation2 + $0x8] sm:$0xff] %vm420, %v413
      %423 = vst.msk [vmem:[#allocation2 + $0x10] sm:$0xff] %vm420, %v414
      %424 = vst.msk [vmem:[#allocation2 + $0x18] sm:$0xff] %vm420, %v415
      %425 = vst.msk [vmem:[#allocation2 + $0x20] sm:$0xff] %vm420, %v416
      %426 = vst.msk [vmem:[#allocation2 + $0x28] sm:$0xff] %vm420, %v417
      %427 = vst.msk [vmem:[#allocation2 + $0x30] sm:$0xff] %vm420, %v418
      %428 = vst.msk [vmem:[#allocation2 + $0x38] sm:$0xff] %vm420, %v419
      // Predicated region
      $region41: #{tpu_custom_call.1} parent=35 // pred_check
        %p429 = pneg %p226
      $region42: #{tpu_custom_call.1} parent=35 // pred_check_branch
        %431 = sbr.rel (%p429) target = $region44
      $region43: #{tpu_custom_call.1} parent=35 // pred_region
        %v432 = vld [vmem:[#allocation2] sm:$0xff]
        %v433 = vld [vmem:[#allocation2 + $0x8] sm:$0xff]
        %v434 = vld [vmem:[#allocation2 + $0x10] sm:$0xff]
        %v435 = vld [vmem:[#allocation2 + $0x18] sm:$0xff]
        %v436 = vld [vmem:[#allocation2 + $0x20] sm:$0xff]
        %v437 = vld [vmem:[#allocation2 + $0x28] sm:$0xff]
        %v438 = vld [vmem:[#allocation2 + $0x30] sm:$0xff]
        %v439 = vld [vmem:[#allocation2 + $0x38] sm:$0xff]
        %v440 = vmul.f32 %v432, 0.00390625
        %v441 = vmul.f32 %v433, 0.00390625
        %v442 = vmul.f32 %v434, 0.00390625
        %v443 = vmul.f32 %v435, 0.00390625
        %v444 = vmul.f32 %v436, 0.00390625
        %v445 = vmul.f32 %v437, 0.00390625
        %v446 = vmul.f32 %v438, 0.00390625
        %v447 = vmul.f32 %v439, 0.00390625
        %v448 = vld [vmem:[%s2] sm:$0xff]
        %v449 = vld [vmem:[%s2 + $0x8] sm:$0xff]
        %v450 = vld [vmem:[%s2 + $0x10] sm:$0xff]
        %v451 = vld [vmem:[%s2 + $0x18] sm:$0xff]
        %v452 = vld [vmem:[%s3] sm:$0xff]
        %v453 = vld [vmem:[%s3 + $0x8] sm:$0xff]
        %v454 = vld [vmem:[%s3 + $0x10] sm:$0xff]
        %v455 = vld [vmem:[%s3 + $0x18] sm:$0xff]
        %vm456 = vcmask 523264
        %v458 = vsel %vm456, %v448, 0
        %v461 = vsel %vm456, %v449, 0
        %v464 = vsel %vm456, %v450, 0
        %v467 = vsel %vm456, %v451, 0
        %469 = vmatpush.msra.mxu0 0.0
        %470 = vmatpush.msra.mxu0 0.0
        %471 = vmatpush.msra.mxu0 0.0
        %472 = vmatpush.msra.mxu0 0.0
        %473 = vmatpush.msra.mxu0 0.0
        %474 = vmatpush.msra.mxu0 0.0
        %475 = vmatpush.msra.mxu0 0.0
        %476 = vmatpush.msra.mxu0 0.0
        %477 = vmatpush.msra.mxu0 %v447
        %478 = vmatpush.msra.mxu0 %v446
        %479 = vmatpush.msra.mxu0 %v445
        %480 = vmatpush.msra.mxu0 %v444
        %481 = vmatpush.msra.mxu0 %v443
        %482 = vmatpush.msra.mxu0 %v442
        %483 = vmatpush.msra.mxu0 %v441
        %484 = vmatpush.msra.mxu0 %v440
        %485 = vmatmul.f32.gmra.mxu0 %v458
        %v486 = vpop.f32.mrf.mxu0
        %v487 = vadd.f32 %v452, %v486
        %488 = vmatmul.f32.gmra.mxu0 %v461
        %v489 = vpop.f32.mrf.mxu0
        %v490 = vadd.f32 %v453, %v489
        %491 = vmatmul.f32.gmra.mxu0 %v464
        %v492 = vpop.f32.mrf.mxu0
        %v493 = vadd.f32 %v454, %v492
        %494 = vmatmul.f32.gmra.mxu0 %v467
        %v495 = vpop.f32.mrf.mxu0
        %v496 = vadd.f32 %v455, %v495
        %497 = vdwg.mxu0
        %498 = vst.msk [vmem:[%s225] sm:$0xff] %vm420, %v487
        %499 = vst.msk [vmem:[%s225 + $0x8] sm:$0xff] %vm420, %v490
        %500 = vst.msk [vmem:[%s225 + $0x10] sm:$0xff] %vm420, %v493
        %501 = vst.msk [vmem:[%s225 + $0x18] sm:$0xff] %vm420, %v496
      $region44: #{tpu_custom_call.1} parent=35 // pred_fallthru
        _
      %p502 = scmp.lt.s32.totalorder %s19, 1
      %s503 = scalar_select %p502, %s19, 1
      %s504 = smul.addr %s503, 4
      %s505 = smul.addr %s504, 8
      %s506 = scalar_lea.vmem %s4, %s505
      // Predicated region
      $region45: #{tpu_custom_call.1} parent=35 // pred_check
        %p507 = pneg %p136
      $region46: #{tpu_custom_call.1} parent=35 // pred_check_branch
        %509 = sbr.rel (%p507) target = $region48
      $region47: #{tpu_custom_call.1} parent=35 // pred_region
        _
      $region48: #{tpu_custom_call.1} parent=35 // pred_fallthru
        _
    $region36: #{tpu_custom_call.1} parent=5 // pred_fallthru
      _
    %p510 = scmp.le.s32.totalorder 2, %s10
    // Predicated region
    $region49: #{tpu_custom_call.1} parent=5 // pred_check
      %p511 = pneg %p510
    $region50: #{tpu_custom_call.1} parent=5 // pred_check_branch
      %513 = sbr.rel (%p511) target = $region52
    $region51: #{tpu_custom_call.1} parent=5 // pred_region
      %s514 = ssub.s32 %s10, 2
      // Predicated region
      $region53: #{tpu_custom_call.1} parent=51 // pred_check
        %p515 = pneg %p142
      $region54: #{tpu_custom_call.1} parent=51 // pred_check_branch
        %517 = sbr.rel (%p515) target = $region56
      $region55: #{tpu_custom_call.1} parent=51 // pred_region
        %p518 = scmp.lt.s32.totalorder %s21, 1
        %s519 = scalar_select %p518, %s21, 1
        %s520 = smul.addr %s519, 4
        %s521 = smul.addr %s520, 8
        %s522 = scalar_lea.vmem %s4, %s521
      $region56: #{tpu_custom_call.1} parent=51 // pred_fallthru
        _
    $region52: #{tpu_custom_call.1} parent=5 // pred_fallthru
      _
  $region6: #{tpu_custom_call.1} parent=0 // loop_footer
    %s14 = sadd.s32 1, %s10
  $region7: #{tpu_custom_call.1} parent=0 // loop_footer_branch
    %9 = sbr.rel target = $region3
  $region8: #{tpu_custom_call.1} parent=0 // loop_exit
    _

</llo_original>
